<compile_context>
chip_gen: v5e
topology: v5e:2x2
jax: 0.10.0
libtpu: 0.0.40
codegen_flags: <defaults>
</compile_context>

<pallas_src>
import jax
import jax.numpy as jnp
from jax.experimental import pallas as pl
from jax.experimental.pallas import tpu as pltpu


_MAX_LANES = 1024          # max lane width per tile (multiple of 128 -> dense vst)
_TILE_BYTES = 1 << 20      # per-wire slab bytes per grid step
                           # (6 slabs x 2 buffers ~= 12 MiB VMEM at the cap)


def _causal_arithmetic2_kernel(x_ref, o_ref, s2_ref):
    # x_ref: (1, 4, tr, L)  -- wire axis in a leading (untiled) block dim, so
    # each row below is a dense, full-vreg (tr, L) tile. Pure VPU adds.
    w = x_ref[0, 0]
    x = x_ref[0, 1]
    y = x_ref[0, 2]
    z = x_ref[0, 3]
    s2 = (w + x) + y          # S2 = (w + x) + y
    s2_ref[0] = s2
    o_ref[0] = s2 + z         # O = S2 + z


def _round_up(a, b):
    return ((a + b - 1) // b) * b


def _pick_lane(S):
    """Lane width L and (possibly padded) flat size. Avoids padding whenever
    possible: L == full dim is always layout-legal, otherwise pick a
    multiple-of-128 divisor of S."""
    if S <= _MAX_LANES:
        return S, S
    for L in range(_MAX_LANES, 127, -128):
        if S % L == 0:
            return L, S
    # Rare ragged case: no multiple-of-128 divisor -> pad (one extra copy).
    return _MAX_LANES, _round_up(S, _MAX_LANES)


def _pick_rows(R, L, itemsize, min_tiles):
    """Rows-per-tile tr and (possibly padded) row count."""
    sub = max(8, 32 // itemsize)                  # sublane granule: f32 8, bf16 16, i8 32
    cap = max(1, _TILE_BYTES // (L * itemsize))   # per-wire slab per tile <= _TILE_BYTES
    if min_tiles > 1 and R >= min_tiles * sub:
        # Ensure >= min_tiles grid steps along the row axis (v7x megacore).
        cap = min(cap, (R // min_tiles // sub) * sub)
    if R <= cap:
        return R, R                               # block rows == full dim: always legal
    cap = max(sub, (cap // sub) * sub)
    for tr in range(cap, sub - 1, -sub):
        if R % tr == 0:
            return tr, R
    return cap, _round_up(R, cap)                 # rare ragged case: pad rows


@jax.jit
def causal_arithmetic2(inp):
    """inp: (B, 4, *spatial). Returns (O, S2), each of shape (B, *spatial)."""
    assert inp.ndim >= 2 and inp.shape[1] == 4, "wire axis (dim 1) must have size 4"
    B = inp.shape[0]
    trailing = inp.shape[2:]
    S = 1
    for d in trailing:
        S *= int(d)
    itemsize = jnp.dtype(inp.dtype).itemsize

    # ---- tiling: lane width L and rows-per-tile tr (no padding if divisible)
    L, S_lane_pad = _pick_lane(S)
    R = S_lane_pad // L
    min_tiles = 2 if B == 1 else 1                # make both v7x TCs busy when B == 1
    tr, R_pad = _pick_rows(R, L, itemsize, min_tiles)
    padded = (R_pad * L != S)

    # ---- layout: single free reshape, wire axis kept as a leading block dim
    x3 = inp.reshape(B, 4, S)                     # contiguous -> free
    if padded:
        # Rare ragged-shape path only: zero pad (safe for pure adds).
        x3 = jnp.pad(x3, ((0, 0), (0, 0), (0, R_pad * L - S)))
    x4 = x3.reshape(B, 4, R_pad, L)               # contiguous -> free

    grid = (B, R_pad // tr)
    in_spec = pl.BlockSpec((1, 4, tr, L), lambda b, r: (b, 0, r, 0))
    out_spec = pl.BlockSpec((1, tr, L), lambda b, r: (b, r, 0))

    o4, s24 = pl.pallas_call(
        _causal_arithmetic2_kernel,
        out_shape=(
            jax.ShapeDtypeStruct((B, R_pad, L), inp.dtype),   # O
            jax.ShapeDtypeStruct((B, R_pad, L), inp.dtype),   # S2
        ),
        grid=grid,
        in_specs=[in_spec],
        out_specs=(out_spec, out_spec),
        compiler_params=pltpu.CompilerParams(
            dimension_semantics=("parallel", "parallel"),
            vmem_limit_bytes=32 * 1024 * 1024,    # headroom on v5e; <= v7x physical
        ),
        cost_estimate=pl.CostEstimate(
            flops=3 * B * R_pad * L,              # 3 adds per output element
            transcendentals=0,
            bytes_accessed=6 * B * R_pad * L * itemsize,   # 4 reads + 2 writes
        ),
    )(x4)

    out_shape = (B,) + trailing
    if padded:
        o = o4.reshape(B, R_pad * L)[:, :S].reshape(out_shape)
        s2 = s24.reshape(B, R_pad * L)[:, :S].reshape(out_shape)
    else:
        o = o4.reshape(out_shape)                 # free reshapes, no un-pad copy
        s2 = s24.reshape(out_shape)
    return o, s2


def _reference(inp):
    w = inp[:, 0]
    x = inp[:, 1]
    y = inp[:, 2]
    z = inp[:, 3]
    s2 = (w + x) + y
    o = s2 + z
    return o, s2


if __name__ == "__main__":
    key = jax.random.PRNGKey(0)
    # Example input consistent with the forward: batch=2, wire axis=4, spatial 16x16.
    inp = jax.random.normal(key, (2, 4, 16, 16), dtype=jnp.float32)

    o, s2 = causal_arithmetic2(inp)
    jax.block_until_ready((o, s2))

    o_ref, s2_ref = _reference(inp)
    assert o.shape == o_ref.shape and s2.shape == s2_ref.shape
    assert jnp.allclose(o, o_ref, atol=1e-6), "O mismatch"
    assert jnp.allclose(s2, s2_ref, atol=1e-6), "S2 mismatch"

    print("KERNEL_OK")
</pallas_src>

<mosaic_0001>
module attributes {stable_mosaic.version = 11 : i64} {
  func.func @_causal_arithmetic2_kernel(%arg0: i32, %arg1: i32, %arg2: memref<1x4x1x256xf32, #tpu.memory_space<vmem>>, %arg3: memref<1x1x256xf32, #tpu.memory_space<vmem>>, %arg4: memref<1x1x256xf32, #tpu.memory_space<vmem>>) attributes {dimension_semantics = [#tpu.dimension_semantics<parallel>, #tpu.dimension_semantics<parallel>], iteration_bounds = array<i64: 2, 1>, scalar_prefetch = 0 : i64, scratch_operands = 0 : i64, tpu.core_type = #tpu.core_type<tc>, window_params = [{transform_indices = @transform_0, window_bounds = array<i64: 1, 4, 1, 256>}, {transform_indices = @transform_1, window_bounds = array<i64: 1, 1, 256>}, {transform_indices = @transform_2, window_bounds = array<i64: 1, 1, 256>}]} {
    %c0 = arith.constant 0 : index
    %c0_0 = arith.constant 0 : index
    %c0_1 = arith.constant 0 : index
    %c0_2 = arith.constant 0 : index
    %0 = vector.load %arg2[%c0, %c0_0, %c0_1, %c0_2] : memref<1x4x1x256xf32, #tpu.memory_space<vmem>>, vector<1x1x1x256xf32>
    %1 = vector.shape_cast %0 : vector<1x1x1x256xf32> to vector<1x256xf32>
    %c0_3 = arith.constant 0 : index
    %c1 = arith.constant 1 : index
    %c0_4 = arith.constant 0 : index
    %c0_5 = arith.constant 0 : index
    %2 = vector.load %arg2[%c0_3, %c1, %c0_4, %c0_5] : memref<1x4x1x256xf32, #tpu.memory_space<vmem>>, vector<1x1x1x256xf32>
    %3 = vector.shape_cast %2 : vector<1x1x1x256xf32> to vector<1x256xf32>
    %c0_6 = arith.constant 0 : index
    %c2 = arith.constant 2 : index
    %c0_7 = arith.constant 0 : index
    %c0_8 = arith.constant 0 : index
    %4 = vector.load %arg2[%c0_6, %c2, %c0_7, %c0_8] : memref<1x4x1x256xf32, #tpu.memory_space<vmem>>, vector<1x1x1x256xf32>
    %5 = vector.shape_cast %4 : vector<1x1x1x256xf32> to vector<1x256xf32>
    %c0_9 = arith.constant 0 : index
    %c3 = arith.constant 3 : index
    %c0_10 = arith.constant 0 : index
    %c0_11 = arith.constant 0 : index
    %6 = vector.load %arg2[%c0_9, %c3, %c0_10, %c0_11] : memref<1x4x1x256xf32, #tpu.memory_space<vmem>>, vector<1x1x1x256xf32>
    %7 = vector.shape_cast %6 : vector<1x1x1x256xf32> to vector<1x256xf32>
    %8 = arith.addf %1, %3 : vector<1x256xf32>
    %9 = arith.addf %8, %5 : vector<1x256xf32>
    %c0_12 = arith.constant 0 : index
    %c0_13 = arith.constant 0 : index
    %c0_14 = arith.constant 0 : index
    %10 = vector.load %arg4[%c0_12, %c0_13, %c0_14] : memref<1x1x256xf32, #tpu.memory_space<vmem>>, vector<1x1x256xf32>
    %11 = vector.shape_cast %10 : vector<1x1x256xf32> to vector<1x256xf32>
    %12 = vector.shape_cast %9 : vector<1x256xf32> to vector<1x1x256xf32>
    tpu.vector_store %arg4[%c0_12, %c0_13, %c0_14], %12 {strides = array<i32>} : memref<1x1x256xf32, #tpu.memory_space<vmem>>, vector<1x1x256xf32>,
    %13 = arith.addf %9, %7 : vector<1x256xf32>
    %c0_15 = arith.constant 0 : index
    %c0_16 = arith.constant 0 : index
    %c0_17 = arith.constant 0 : index
    %14 = vector.load %arg3[%c0_15, %c0_16, %c0_17] : memref<1x1x256xf32, #tpu.memory_space<vmem>>, vector<1x1x256xf32>
    %15 = vector.shape_cast %14 : vector<1x1x256xf32> to vector<1x256xf32>
    %16 = vector.shape_cast %13 : vector<1x256xf32> to vector<1x1x256xf32>
    tpu.vector_store %arg3[%c0_15, %c0_16, %c0_17], %16 {strides = array<i32>} : memref<1x1x256xf32, #tpu.memory_space<vmem>>, vector<1x1x256xf32>,
    return
  }
  func.func @transform_0(%arg0: i32, %arg1: i32) -> (i32, i32, i32, i32) {
    %c0_i32 = arith.constant 0 : i32
    %c0_i32_0 = arith.constant 0 : i32
    %c0_i32_1 = arith.constant 0 : i32
    return %arg0, %c0_i32, %arg1, %c0_i32_0 : i32, i32, i32, i32
  }
  func.func @transform_1(%arg0: i32, %arg1: i32) -> (i32, i32, i32) {
    %c0_i32 = arith.constant 0 : i32
    %c0_i32_0 = arith.constant 0 : i32
    return %arg0, %arg1, %c0_i32 : i32, i32, i32
  }
  func.func @transform_2(%arg0: i32, %arg1: i32) -> (i32, i32, i32) {
    %c0_i32 = arith.constant 0 : i32
    %c0_i32_0 = arith.constant 0 : i32
    return %arg0, %arg1, %c0_i32 : i32, i32, i32
  }
}

</mosaic_0001>

<llo_original>
// kernel: causal_arithmetic2.1
$region0: #{causal_arithmetic2.1}
  #allocation0 [shape = 'u32[]', space=smem, size = 0x4, offset = 0x4, fixed_abs, tag = 'smem constant byte address 0x4 - core index']
  #allocation1 [shape = 'u32[72,128]{1,0:T(1,128)}', space=vmem, size = 0x9000, scoped, tag = 'internal scratch']
  %s0 = inlined_call_operand.vmem [shape: f32[2,4,1,256], index: 0, kind: input, shape index: {}]
  %s1 = inlined_call_operand.vmem [shape: f32[2,1,256], index: 1, kind: output, shape index: {0}]
  %s2 = inlined_call_operand.vmem [shape: f32[2,1,256], index: 2, kind: output, shape index: {1}]
  %3 = xla_tuple %s1, %s2
  %s4 = sld [smem:[#allocation0]]
  $region45: #{causal_arithmetic2.1} parent=0
    _
  %s6 = ssub.s32 1, %s4
  %s7 = scalar_select 0, %s6, %s4
  loop: start=0, step=1, limit=4
  $region2: #{causal_arithmetic2.1} parent=0 // loop_pre_header
    _
  $region3: #{causal_arithmetic2.1} parent=0 // loop_header
    %s9 = sphi 0, %s13
    %p10 = scmp.ge.s32.totalorder %s9, 4
    %s16 = sphi 0, %s28
    %s17 = sphi 0, %s24
    %s18 = sphi 0, %s16
    %s19 = sphi 0, %s17
    %s20 = sphi 0, %s18
    %s21 = sphi 0, %s19
    %s33 = sphi 0, %s35
    %s36 = sphi 0, %s33
    %s37 = sphi 0, %s36
    %s53 = sphi 0, %s37
    %s61 = sphi 0, %s63
    %s64 = sphi 0, %s61
    %s65 = sphi 0, %s64
    %s81 = sphi 0, %s65
    %s89 = sphi 0, %s91
    %s92 = sphi 0, %s89
    %s93 = sphi 0, %s92
    %s109 = sphi 0, %s93
  $region4: #{causal_arithmetic2.1} parent=0 // loop_header_branch
    %12 = sbr.rel (%p10) target = $region8
  $region5: #{causal_arithmetic2.1} parent=0 // loop_body
    %s14 = ssub.s32 %s9, 1
    %s15 = ssub.s32 %s9, 2
    %s22 = sadd.s32 1, %s17
    %p23 = scmp.ge.s32.totalorder %s22, 1
    %s24 = scalar_select %p23, 0, %s22
    %s25 = sadd.s32 1, %s16
    %s26 = scalar_select %p23, %s25, %s16
    %p27 = scmp.ge.s32.totalorder %s26, 2
    %s28 = scalar_select %p27, 0, %s26
    %s29 = ssub.s32 %s16, %s28
    %s30 = ssub.s32 %s17, %s24
    %s31 = sor.u32 %s29, %s30
    %p32 = scmp.eq.s32.totalorder %s31, 0
    %s34 = sadd.s32 %s33, 1
    %s35 = scalar_select %p32, %s33, %s34
    %p38 = pneg %p32
    %p39 = scmp.eq.s32.totalorder %s9, 1
    %p40 = por %p38, %p39
    %p41 = scmp.ne.s32.totalorder %s33, %s36
    %p42 = scmp.eq.s32.totalorder %s9, 0
    %p43 = por %p41, %p42
    %p44 = scmp.ne.s32.totalorder %s33, %s36
    %p45 = scmp.eq.s32.totalorder %s14, 1
    %p46 = por %p44, %p45
    %p47 = scmp.ne.s32.totalorder %s36, %s37
    %p48 = scmp.eq.s32.totalorder %s14, 0
    %p49 = por %p47, %p48
    %p50 = scmp.ne.s32.totalorder %s36, %s37
    %p51 = scmp.eq.s32.totalorder %s15, 1
    %p52 = por %p50, %p51
    %p54 = scmp.ne.s32.totalorder %s37, %s53
    %p55 = scmp.eq.s32.totalorder %s15, 0
    %p56 = por %p54, %p55
    %s57 = ssub.s32 %s16, %s28
    %s58 = ssub.s32 %s17, %s24
    %s59 = sor.u32 %s57, %s58
    %p60 = scmp.eq.s32.totalorder %s59, 0
    %s62 = sadd.s32 %s61, 1
    %s63 = scalar_select %p60, %s61, %s62
    %p66 = pneg %p60
    %p67 = scmp.eq.s32.totalorder %s9, 1
    %p68 = por %p66, %p67
    %p69 = scmp.ne.s32.totalorder %s61, %s64
    %p70 = scmp.eq.s32.totalorder %s9, 0
    %p71 = por %p69, %p70
    %p72 = scmp.ne.s32.totalorder %s61, %s64
    %p73 = scmp.eq.s32.totalorder %s14, 1
    %p74 = por %p72, %p73
    %p75 = scmp.ne.s32.totalorder %s64, %s65
    %p76 = scmp.eq.s32.totalorder %s14, 0
    %p77 = por %p75, %p76
    %p78 = scmp.ne.s32.totalorder %s64, %s65
    %p79 = scmp.eq.s32.totalorder %s15, 1
    %p80 = por %p78, %p79
    %p82 = scmp.ne.s32.totalorder %s65, %s81
    %p83 = scmp.eq.s32.totalorder %s15, 0
    %p84 = por %p82, %p83
    %s85 = ssub.s32 %s16, %s28
    %s86 = ssub.s32 %s17, %s24
    %s87 = sor.u32 %s85, %s86
    %p88 = scmp.eq.s32.totalorder %s87, 0
    %s90 = sadd.s32 %s89, 1
    %s91 = scalar_select %p88, %s89, %s90
    %p94 = pneg %p88
    %p95 = scmp.eq.s32.totalorder %s9, 1
    %p96 = por %p94, %p95
    %p97 = scmp.ne.s32.totalorder %s89, %s92
    %p98 = scmp.eq.s32.totalorder %s9, 0
    %p99 = por %p97, %p98
    %p100 = scmp.ne.s32.totalorder %s89, %s92
    %p101 = scmp.eq.s32.totalorder %s14, 1
    %p102 = por %p100, %p101
    %p103 = scmp.ne.s32.totalorder %s92, %s93
    %p104 = scmp.eq.s32.totalorder %s14, 0
    %p105 = por %p103, %p104
    %p106 = scmp.ne.s32.totalorder %s92, %s93
    %p107 = scmp.eq.s32.totalorder %s15, 1
    %p108 = por %p106, %p107
    %p110 = scmp.ne.s32.totalorder %s93, %s109
    %p111 = scmp.eq.s32.totalorder %s15, 0
    %p112 = por %p110, %p111
    %p113 = scmp.le.s32.totalorder 1, %s9
    %p114 = scmp.lt.s32.totalorder %s9, 3
    %p115 = pnand %p113, %p114
    %p116 = pneg %p115
    // Predicated region
    $region9: #{causal_arithmetic2.1} parent=5 // pred_check
      _
    $region10: #{causal_arithmetic2.1} parent=5 // pred_check_branch
      %118 = sbr.rel (%p115) target = $region12
    $region11: #{causal_arithmetic2.1} parent=5 // pred_region
      %s119 = ssub.s32 %s9, 1
    $region12: #{causal_arithmetic2.1} parent=5 // pred_fallthru
      _
    %p120 = scmp.lt.s32.totalorder %s9, 2
    // Predicated region
    $region13: #{causal_arithmetic2.1} parent=5 // pred_check
      %p121 = pneg %p120
    $region14: #{causal_arithmetic2.1} parent=5 // pred_check_branch
      %123 = sbr.rel (%p121) target = $region16
    $region15: #{causal_arithmetic2.1} parent=5 // pred_region
      // Predicated region
      $region17: #{causal_arithmetic2.1} parent=15 // pred_check
        %p124 = pneg %p43
      $region18: #{causal_arithmetic2.1} parent=15 // pred_check_branch
        %126 = sbr.rel (%p124) target = $region20
      $region19: #{causal_arithmetic2.1} parent=15 // pred_region
        %p127 = scmp.lt.s32.totalorder %s16, 1
        %s128 = scalar_select %p127, %s16, 1
        %p129 = scmp.lt.s32.totalorder %s17, 0
        %s130 = scalar_select %p129, %s17, 0
        %s131 = smul.addr %s130, 2
        %s132 = smul.addr %s128, 8
        %s133 = sadd.s32 %s131, %s132
        %s134 = scalar_lea.vmem %s0, %s133
      $region20: #{causal_arithmetic2.1} parent=15 // pred_fallthru
        _
    $region16: #{causal_arithmetic2.1} parent=5 // pred_fallthru
      _
    %p135 = scmp.le.s32.totalorder 1, %s9
    %p136 = scmp.lt.s32.totalorder %s9, 3
    %p137 = pnand %p135, %p136
    %p138 = pneg %p137
    // Predicated region
    $region21: #{causal_arithmetic2.1} parent=5 // pred_check
      _
    $region22: #{causal_arithmetic2.1} parent=5 // pred_check_branch
      %140 = sbr.rel (%p137) target = $region24
    $region23: #{causal_arithmetic2.1} parent=5 // pred_region
      %s141 = ssub.s32 %s9, 1
      %p142 = scmp.lt.s32.totalorder %s18, 1
      %s143 = scalar_select %p142, %s18, 1
      %p144 = scmp.lt.s32.totalorder %s19, 0
      %s145 = scalar_select %p144, %s19, 0
      %s146 = smul.addr %s145, 2
      %s147 = smul.addr %s143, 8
      %s148 = sadd.s32 %s146, %s147
      %s149 = scalar_lea.vmem %s0, %s148
      %p150 = pneg %p49
      %p151 = pneg %p46
      %p152 = pneg %p77
      %p153 = pneg %p74
      %p154 = scmp.lt.s32.totalorder %s18, 1
      %s155 = scalar_select %p154, %s18, 1
      %p156 = scmp.lt.s32.totalorder %s19, 0
      %s157 = scalar_select %p156, %s19, 0
      %s158 = smul.addr %s157, 2
      %s159 = smul.addr %s155, 2
      %s160 = sadd.s32 %s158, %s159
      %s161 = scalar_lea.vmem %s1, %s160
      %p162 = pneg %p105
      %p163 = pneg %p102
      %p164 = scmp.lt.s32.totalorder %s18, 1
      %s165 = scalar_select %p164, %s18, 1
      %p166 = scmp.lt.s32.totalorder %s19, 0
      %s167 = scalar_select %p166, %s19, 0
      %s168 = smul.addr %s167, 2
      %s169 = smul.addr %s165, 2
      %s170 = sadd.s32 %s168, %s169
      %s171 = scalar_lea.vmem %s2, %s170
      %p172 = scmp.lt.s32.totalorder %s18, 1
      %s173 = scalar_select %p172, %s18, 1
      %p174 = scmp.lt.s32.totalorder %s19, 0
      %s175 = scalar_select %p174, %s19, 0
      %s176 = smul.addr %s175, 2
      %s177 = smul.addr %s173, 8
      %s178 = sadd.s32 %s176, %s177
      %s179 = scalar_lea.vmem %s0, %s178
      %p180 = scmp.lt.s32.totalorder %s18, 1
      %s181 = scalar_select %p180, %s18, 1
      %p182 = scmp.lt.s32.totalorder %s19, 0
      %s183 = scalar_select %p182, %s19, 0
      %s184 = smul.addr %s183, 2
      %s185 = smul.addr %s181, 2
      %s186 = sadd.s32 %s184, %s185
      %s187 = scalar_lea.vmem %s1, %s186
      %p188 = scmp.lt.s32.totalorder %s18, 1
      %s189 = scalar_select %p188, %s18, 1
      %p190 = scmp.lt.s32.totalorder %s19, 0
      %s191 = scalar_select %p190, %s19, 0
      %s192 = smul.addr %s191, 2
      %s193 = smul.addr %s189, 2
      %s194 = sadd.s32 %s192, %s193
      %s195 = scalar_lea.vmem %s2, %s194
      %v196 = vld [vmem:[%s179] sm:$0x3]
      %s197 = scalar_lea.vmem %s179, 2
      %v198 = vld [vmem:[%s197] sm:$0x3]
      %s199 = scalar_lea.vmem %s179, 4
      %v200 = vld [vmem:[%s199] sm:$0x3]
      %s201 = scalar_lea.vmem %s179, 6
      %v202 = vld [vmem:[%s201] sm:$0x3]
      %v203 = vadd.f32 %v196, %v198
      %v204 = vadd.f32 %v203, %v200
      %v205 = vlaneseq
      %vm206 = vcmp.ge.s32.totalorder %v205, 0
      %vm207 = vcmp.lt.s32.totalorder %v205, 256
      %vm208 = vmand %vm206, %vm207
      %209 = vst.msk [vmem:[%s195] sm:$0x3] %vm208, %v204
      %v210 = vadd.f32 %v204, %v202
      %211 = vst.msk [vmem:[%s187] sm:$0x3] %vm208, %v210
      %p212 = scmp.lt.s32.totalorder %s18, 1
      %s213 = scalar_select %p212, %s18, 1
      %p214 = scmp.lt.s32.totalorder %s19, 0
      %s215 = scalar_select %p214, %s19, 0
      %s216 = smul.addr %s215, 2
      %s217 = smul.addr %s213, 2
      %s218 = sadd.s32 %s216, %s217
      %s219 = scalar_lea.vmem %s1, %s218
      %p220 = scmp.lt.s32.totalorder %s18, 1
      %s221 = scalar_select %p220, %s18, 1
      %p222 = scmp.lt.s32.totalorder %s19, 0
      %s223 = scalar_select %p222, %s19, 0
      %s224 = smul.addr %s223, 2
      %s225 = smul.addr %s221, 2
      %s226 = sadd.s32 %s224, %s225
      %s227 = scalar_lea.vmem %s2, %s226
      // Predicated region
      $region25: #{causal_arithmetic2.1} parent=23 // pred_check
        %p228 = pneg %p74
      $region26: #{causal_arithmetic2.1} parent=23 // pred_check_branch
        %230 = sbr.rel (%p228) target = $region28
      $region27: #{causal_arithmetic2.1} parent=23 // pred_region
        _
      $region28: #{causal_arithmetic2.1} parent=23 // pred_fallthru
        _
      // Predicated region
      $region29: #{causal_arithmetic2.1} parent=23 // pred_check
        %p231 = pneg %p102
      $region30: #{causal_arithmetic2.1} parent=23 // pred_check_branch
        %233 = sbr.rel (%p231) target = $region32
      $region31: #{causal_arithmetic2.1} parent=23 // pred_region
        _
      $region32: #{causal_arithmetic2.1} parent=23 // pred_fallthru
        _
    $region24: #{causal_arithmetic2.1} parent=5 // pred_fallthru
      _
    %p234 = scmp.le.s32.totalorder 2, %s9
    // Predicated region
    $region33: #{causal_arithmetic2.1} parent=5 // pred_check
      %p235 = pneg %p234
    $region34: #{causal_arithmetic2.1} parent=5 // pred_check_branch
      %237 = sbr.rel (%p235) target = $region36
    $region35: #{causal_arithmetic2.1} parent=5 // pred_region
      %s238 = ssub.s32 %s9, 2
      // Predicated region
      $region37: #{causal_arithmetic2.1} parent=35 // pred_check
        %p239 = pneg %p80
      $region38: #{causal_arithmetic2.1} parent=35 // pred_check_branch
        %241 = sbr.rel (%p239) target = $region40
      $region39: #{causal_arithmetic2.1} parent=35 // pred_region
        %p242 = scmp.lt.s32.totalorder %s20, 1
        %s243 = scalar_select %p242, %s20, 1
        %p244 = scmp.lt.s32.totalorder %s21, 0
        %s245 = scalar_select %p244, %s21, 0
        %s246 = smul.addr %s245, 2
        %s247 = smul.addr %s243, 2
        %s248 = sadd.s32 %s246, %s247
        %s249 = scalar_lea.vmem %s1, %s248
      $region40: #{causal_arithmetic2.1} parent=35 // pred_fallthru
        _
      // Predicated region
      $region41: #{causal_arithmetic2.1} parent=35 // pred_check
        %p250 = pneg %p108
      $region42: #{causal_arithmetic2.1} parent=35 // pred_check_branch
        %252 = sbr.rel (%p250) target = $region44
      $region43: #{causal_arithmetic2.1} parent=35 // pred_region
        %p253 = scmp.lt.s32.totalorder %s20, 1
        %s254 = scalar_select %p253, %s20, 1
        %p255 = scmp.lt.s32.totalorder %s21, 0
        %s256 = scalar_select %p255, %s21, 0
        %s257 = smul.addr %s256, 2
        %s258 = smul.addr %s254, 2
        %s259 = sadd.s32 %s257, %s258
        %s260 = scalar_lea.vmem %s2, %s259
      $region44: #{causal_arithmetic2.1} parent=35 // pred_fallthru
        _
    $region36: #{causal_arithmetic2.1} parent=5 // pred_fallthru
      _
  $region6: #{causal_arithmetic2.1} parent=0 // loop_footer
    %s13 = sadd.s32 1, %s9
  $region7: #{causal_arithmetic2.1} parent=0 // loop_footer_branch
    %8 = sbr.rel target = $region3
  $region8: #{causal_arithmetic2.1} parent=0 // loop_exit
    _

</llo_original>
